<compile_context>
chip_gen: v5e
topology: v5e:2x2
jax: 0.10.0
libtpu: 0.0.40
codegen_flags: <defaults>
</compile_context>

<pallas_src>
import functools

import jax
import jax.numpy as jnp
from jax.experimental import pallas as pl
from jax.experimental.pallas import tpu as pltpu


def _crop_kernel(shift_ref, x_ref, o_ref, *, pad, bn, C, H, W, sel_dtype):
    """Crop `bn` images from their (virtually) replicate-padded versions at the
    integer offsets (sx, sy) read from SMEM."""
    CH = C * H
    base = pl.program_id(0) * bn

    # Index iotas, hoisted out of the image loop (built once per grid step).
    col_k = jax.lax.broadcasted_iota(jnp.int32, (W, W), 0)   # source column
    col_j = jax.lax.broadcasted_iota(jnp.int32, (W, W), 1)   # output column
    row_i = jax.lax.broadcasted_iota(jnp.int32, (H, H), 0)   # output row
    row_k = jax.lax.broadcasted_iota(jnp.int32, (H, H), 1)   # source row

    def body(b, carry):
        idx = base + b
        # Integer shifts for this image (clamped as cheap OOB insurance).
        sx = jnp.clip(shift_ref[2 * idx], 0, 2 * pad)
        sy = jnp.clip(shift_ref[2 * idx + 1], 0, 2 * pad)
        d_c = sx - pad
        d_r = sy - pad

        # Exact 0/1 selection matrices with replicate padding folded in.
        csel = (col_k == jnp.clip(col_j + d_c, 0, W - 1)).astype(sel_dtype)  # (W, W)
        rsel = (row_k == jnp.clip(row_i + d_r, 0, H - 1)).astype(sel_dtype)  # (H, H)

        # Column crop, batched over all channels: one (C*H, W) @ (W, W) matmul.
        img = x_ref[b].reshape(CH, W).astype(sel_dtype)
        y = jnp.dot(img, csel, preferred_element_type=jnp.float32)           # (C*H, W)

        # Row crop: rsel is shared across channels; cheap (H,H)@(H,W) per channel.
        outs = []
        for c in range(C):
            yc = y[c * H:(c + 1) * H, :].astype(sel_dtype)
            outs.append(jnp.dot(rsel, yc, preferred_element_type=jnp.float32))
        out = jnp.stack(outs, axis=0)                                        # (C, H, W)

        # Single store per image (all channels at once).
        o_ref[b] = out.astype(o_ref.dtype)
        return carry

    jax.lax.fori_loop(0, bn, body, 0)


def _vmem_capacity_bytes():
    try:
        cap = getattr(pltpu.get_tpu_info(), "vmem_capacity_bytes", None)
        if cap:
            return int(cap)
    except Exception:
        pass
    return 64 << 20   # conservative fallback (v7x per-core VMEM)


def _random_shift_crop(x, shift, pad):
    """out[b,c,i,j] = x_replicate_padded[b, c, i + shift[b,1], j + shift[b,0]]."""
    n, c, h, w = x.shape
    per_img = c * h * w * x.dtype.itemsize

    # VMEM-capacity-aware budget: v7x 64 MiB -> ~56 MiB, v5e/v6e 128 MiB -> ~120 MiB.
    budget = max(32 << 20, min(_vmem_capacity_bytes(), 128 << 20) - (8 << 20))
    # In-kernel per-image value temporaries (f32): img/y/outs/out + csel/rsel/iotas.
    trans = 5 * c * h * w * 4 + 4 * (w * w + h * h) * 4 + (2 << 20)
    blk_budget = max(per_img, (budget - trans - (2 << 20)) // 4)  # 2x in + 2x out bufs

    bn_cap = int(max(1, min(blk_budget // per_img, (16 << 20) // per_img, 64, n)))
    if n >= 2:
        # Keep >= 2 grid steps so both TensorCores get work on v7x.
        bn_cap = min(bn_cap, int(pl.cdiv(n, 2)))
    # Prefer a divisor of n close to the cap (no tail padding); otherwise keep the
    # cap and pad the tail (never collapse to bn=1 for awkward batch sizes).
    bn = bn_cap
    for cand in range(bn_cap, 0, -1):
        if n % cand == 0:
            if 2 * cand >= bn_cap:
                bn = cand
            break

    num_blocks = int(pl.cdiv(n, bn))
    n_pad = num_blocks * bn
    if n_pad != n:
        x_in = jnp.concatenate([x, jnp.zeros((n_pad - n, c, h, w), x.dtype)], axis=0)
        shift_in = jnp.concatenate(
            [shift.astype(jnp.int32), jnp.zeros((n_pad - n, 2), jnp.int32)], axis=0)
    else:
        x_in, shift_in = x, shift.astype(jnp.int32)

    # Flat 1-D SMEM layout: [sx0, sy0, sx1, sy1, ...] (avoids 2-D SMEM padding).
    shift_flat = shift_in.reshape(-1)

    sel_dtype = x.dtype if jnp.issubdtype(x.dtype, jnp.floating) else jnp.float32

    vmem_need = 4 * bn * per_img + trans
    vmem_limit = int(min(max(vmem_need, 32 << 20), budget))

    kernel = functools.partial(_crop_kernel, pad=pad, bn=bn, C=c, H=h, W=w,
                               sel_dtype=sel_dtype)

    out = pl.pallas_call(
        kernel,
        out_shape=jax.ShapeDtypeStruct((n_pad, c, h, w), x.dtype),
        grid_spec=pltpu.PrefetchScalarGridSpec(
            num_scalar_prefetch=1,            # shift -> SMEM
            grid=(num_blocks,),
            in_specs=[pl.BlockSpec((bn, c, h, w), lambda i, s: (i, 0, 0, 0))],
            out_specs=pl.BlockSpec((bn, c, h, w), lambda i, s: (i, 0, 0, 0)),
        ),
        compiler_params=pltpu.CompilerParams(
            dimension_semantics=("parallel",),
            vmem_limit_bytes=vmem_limit,
        ),
    )(shift_flat, x_in)

    return out[:n] if n_pad != n else out


def random_shifts_aug(x, key, pad):
    """Equivalent of RandomShiftsAug(pad).forward(x) with JAX-side RNG."""
    n, c, h, w = x.shape
    assert h == w
    if pad == 0:
        return x
    # Same distribution as torch.randint(0, 2*pad+1, (n, 1, 1, 2)).
    shift = jax.random.randint(key, (n, 2), 0, 2 * pad + 1).astype(jnp.int32)
    return _random_shift_crop(x, shift, pad)


if __name__ == "__main__":
    key = jax.random.PRNGKey(0)
    k_data, k_shift = jax.random.split(key)

    N, C, H, W = 2, 4, 16, 16
    PAD = 4
    x = jax.random.normal(k_data, (N, C, H, W), dtype=jnp.float32)

    out = random_shifts_aug(x, k_shift, PAD)
    out = jax.block_until_ready(out)

    # Reference: the integer shifts make the op an exact crop of the
    # replicate-padded image at offset (shift_y, shift_x).
    shift = jax.random.randint(k_shift, (N, 2), 0, 2 * PAD + 1)
    xp = jnp.pad(x, ((0, 0), (0, 0), (PAD, PAD), (PAD, PAD)), mode='edge')
    ref = jnp.stack([
        jax.lax.dynamic_slice(xp[b], (0, int(shift[b, 1]), int(shift[b, 0])),
                              (C, H, W))
        for b in range(N)
    ])

    assert out.shape == (N, C, H, W) and out.dtype == x.dtype
    assert jnp.allclose(out, ref, atol=1e-4, rtol=1e-4), \
        float(jnp.max(jnp.abs(out - ref)))

    print("KERNEL_OK")
</pallas_src>

<mosaic_0001>
module attributes {stable_mosaic.version = 11 : i64} {
  func.func @_crop_kernel(%arg0: i32, %arg1: memref<4xi32, #tpu.memory_space<smem>>, %arg2: memref<1x4x16x16xf32, #tpu.memory_space<vmem>>, %arg3: memref<1x4x16x16xf32, #tpu.memory_space<vmem>>) attributes {dimension_semantics = [#tpu.dimension_semantics<parallel>], iteration_bounds = array<i64: 2>, scalar_prefetch = 1 : i64, scratch_operands = 0 : i64, tpu.core_type = #tpu.core_type<tc>, window_params = [{transform_indices = @transform_0, window_bounds = array<i64: 1, 4, 16, 16>}, {transform_indices = @transform_1, window_bounds = array<i64: 1, 4, 16, 16>}]} {
    %c1_i32 = arith.constant 1 : i32
    %0 = arith.muli %arg0, %c1_i32 : i32
    %1 = tpu.iota {dimensions = array<i32: 0>} : vector<16x16xi32>
    %2 = tpu.iota {dimensions = array<i32: 1>} : vector<16x16xi32>
    %3 = tpu.iota {dimensions = array<i32: 0>} : vector<16x16xi32>
    %4 = tpu.iota {dimensions = array<i32: 1>} : vector<16x16xi32>
    %c0_i32 = arith.constant 0 : i32
    %5 = arith.addi %0, %c0_i32 : i32
    %c2_i32 = arith.constant 2 : i32
    %6 = arith.muli %c2_i32, %5 : i32
    %7 = arith.index_cast %6 : i32 to index
    %8 = memref.load %arg1[%7] : memref<4xi32, #tpu.memory_space<smem>>
    %c0_i32_0 = arith.constant 0 : i32
    %c8_i32 = arith.constant 8 : i32
    %9 = arith.maxsi %c0_i32_0, %8 : i32
    %10 = arith.minsi %c8_i32, %9 : i32
    %c2_i32_1 = arith.constant 2 : i32
    %11 = arith.muli %c2_i32_1, %5 : i32
    %c1_i32_2 = arith.constant 1 : i32
    %12 = arith.addi %11, %c1_i32_2 : i32
    %13 = arith.index_cast %12 : i32 to index
    %14 = memref.load %arg1[%13] : memref<4xi32, #tpu.memory_space<smem>>
    %c0_i32_3 = arith.constant 0 : i32
    %c8_i32_4 = arith.constant 8 : i32
    %15 = arith.maxsi %c0_i32_3, %14 : i32
    %16 = arith.minsi %c8_i32_4, %15 : i32
    %c4_i32 = arith.constant 4 : i32
    %17 = arith.subi %10, %c4_i32 : i32
    %c4_i32_5 = arith.constant 4 : i32
    %18 = arith.subi %16, %c4_i32_5 : i32
    %19 = vector.broadcast %17 : i32 to vector<16x16xi32>
    %20 = arith.addi %2, %19 : vector<16x16xi32>
    %c0_i32_6 = arith.constant 0 : i32
    %c15_i32 = arith.constant 15 : i32
    %21 = vector.broadcast %c0_i32_6 : i32 to vector<16x16xi32>
    %22 = arith.maxsi %21, %20 : vector<16x16xi32>
    %23 = vector.broadcast %c15_i32 : i32 to vector<16x16xi32>
    %24 = arith.minsi %23, %22 : vector<16x16xi32>
    %25 = arith.cmpi eq, %1, %24 : vector<16x16xi32>
    %26 = arith.extui %25 : vector<16x16xi1> to vector<16x16xi32>
    %27 = arith.sitofp %26 : vector<16x16xi32> to vector<16x16xf32>
    %28 = vector.broadcast %18 : i32 to vector<16x16xi32>
    %29 = arith.addi %3, %28 : vector<16x16xi32>
    %c0_i32_7 = arith.constant 0 : i32
    %c15_i32_8 = arith.constant 15 : i32
    %30 = vector.broadcast %c0_i32_7 : i32 to vector<16x16xi32>
    %31 = arith.maxsi %30, %29 : vector<16x16xi32>
    %32 = vector.broadcast %c15_i32_8 : i32 to vector<16x16xi32>
    %33 = arith.minsi %32, %31 : vector<16x16xi32>
    %34 = arith.cmpi eq, %4, %33 : vector<16x16xi32>
    %35 = arith.extui %34 : vector<16x16xi1> to vector<16x16xi32>
    %36 = arith.sitofp %35 : vector<16x16xi32> to vector<16x16xf32>
    %37 = arith.index_cast %c0_i32 : i32 to index
    %c0 = arith.constant 0 : index
    %c0_9 = arith.constant 0 : index
    %c0_10 = arith.constant 0 : index
    %38 = vector.load %arg2[%37, %c0, %c0_9, %c0_10] : memref<1x4x16x16xf32, #tpu.memory_space<vmem>>, vector<1x4x16x16xf32>
    %39 = vector.shape_cast %38 : vector<1x4x16x16xf32> to vector<4x16x16xf32>
    %40 = vector.shape_cast %39 : vector<4x16x16xf32> to vector<64x16xf32>
    %cst = arith.constant dense<0.000000e+00> : vector<64x16xf32>
    %41 = tpu.matmul %40, %27, %cst {dimension_numbers = #tpu.dot_dimension_numbers<[1], [0], [0], [1], [0, 0, 1, 1], [], []>} : vector<64x16xf32>, vector<16x16xf32>, vector<64x16xf32> -> vector<64x16xf32>
    %42 = vector.extract_strided_slice %41 {offsets = [0, 0], sizes = [16, 16], strides = [1, 1]} : vector<64x16xf32> to vector<16x16xf32>
    %cst_11 = arith.constant dense<0.000000e+00> : vector<16x16xf32>
    %43 = tpu.matmul %36, %42, %cst_11 {dimension_numbers = #tpu.dot_dimension_numbers<[1], [0], [0], [1], [0, 0, 1, 1], [], []>} : vector<16x16xf32>, vector<16x16xf32>, vector<16x16xf32> -> vector<16x16xf32>
    %44 = vector.extract_strided_slice %41 {offsets = [16, 0], sizes = [16, 16], strides = [1, 1]} : vector<64x16xf32> to vector<16x16xf32>
    %cst_12 = arith.constant dense<0.000000e+00> : vector<16x16xf32>
    %45 = tpu.matmul %36, %44, %cst_12 {dimension_numbers = #tpu.dot_dimension_numbers<[1], [0], [0], [1], [0, 0, 1, 1], [], []>} : vector<16x16xf32>, vector<16x16xf32>, vector<16x16xf32> -> vector<16x16xf32>
    %46 = vector.extract_strided_slice %41 {offsets = [32, 0], sizes = [16, 16], strides = [1, 1]} : vector<64x16xf32> to vector<16x16xf32>
    %cst_13 = arith.constant dense<0.000000e+00> : vector<16x16xf32>
    %47 = tpu.matmul %36, %46, %cst_13 {dimension_numbers = #tpu.dot_dimension_numbers<[1], [0], [0], [1], [0, 0, 1, 1], [], []>} : vector<16x16xf32>, vector<16x16xf32>, vector<16x16xf32> -> vector<16x16xf32>
    %48 = vector.extract_strided_slice %41 {offsets = [48, 0], sizes = [16, 16], strides = [1, 1]} : vector<64x16xf32> to vector<16x16xf32>
    %cst_14 = arith.constant dense<0.000000e+00> : vector<16x16xf32>
    %49 = tpu.matmul %36, %48, %cst_14 {dimension_numbers = #tpu.dot_dimension_numbers<[1], [0], [0], [1], [0, 0, 1, 1], [], []>} : vector<16x16xf32>, vector<16x16xf32>, vector<16x16xf32> -> vector<16x16xf32>
    %50 = vector.shape_cast %43 : vector<16x16xf32> to vector<1x16x16xf32>
    %51 = vector.shape_cast %45 : vector<16x16xf32> to vector<1x16x16xf32>
    %52 = vector.shape_cast %47 : vector<16x16xf32> to vector<1x16x16xf32>
    %53 = vector.shape_cast %49 : vector<16x16xf32> to vector<1x16x16xf32>
    %54 = tpu.concatenate %50, %51, %52, %53 in 0 : vector<1x16x16xf32>, vector<1x16x16xf32>, vector<1x16x16xf32>, vector<1x16x16xf32> -> vector<4x16x16xf32>
    %55 = arith.index_cast %c0_i32 : i32 to index
    %c0_15 = arith.constant 0 : index
    %c0_16 = arith.constant 0 : index
    %c0_17 = arith.constant 0 : index
    %56 = vector.load %arg3[%55, %c0_15, %c0_16, %c0_17] : memref<1x4x16x16xf32, #tpu.memory_space<vmem>>, vector<1x4x16x16xf32>
    %57 = vector.shape_cast %56 : vector<1x4x16x16xf32> to vector<4x16x16xf32>
    %58 = vector.shape_cast %54 : vector<4x16x16xf32> to vector<1x4x16x16xf32>
    tpu.vector_store %arg3[%55, %c0_15, %c0_16, %c0_17], %58 {strides = array<i32>} : memref<1x4x16x16xf32, #tpu.memory_space<vmem>>, vector<1x4x16x16xf32>,
    %c1_i32_18 = arith.constant 1 : i32
    return
  }
  func.func @transform_0(%arg0: i32, %arg1: memref<4xi32, #tpu.memory_space<smem>>) -> (i32, i32, i32, i32) {
    %c0_i32 = arith.constant 0 : i32
    %c0_i32_0 = arith.constant 0 : i32
    %c0_i32_1 = arith.constant 0 : i32
    %c0_i32_2 = arith.constant 0 : i32
    return %arg0, %c0_i32, %c0_i32_0, %c0_i32_1 : i32, i32, i32, i32
  }
  func.func @transform_1(%arg0: i32, %arg1: memref<4xi32, #tpu.memory_space<smem>>) -> (i32, i32, i32, i32) {
    %c0_i32 = arith.constant 0 : i32
    %c0_i32_0 = arith.constant 0 : i32
    %c0_i32_1 = arith.constant 0 : i32
    %c0_i32_2 = arith.constant 0 : i32
    return %arg0, %c0_i32, %c0_i32_0, %c0_i32_1 : i32, i32, i32, i32
  }
}

</mosaic_0001>

<llo_original>
// kernel: tpu_custom_call.1
$region0: #{tpu_custom_call.1}
  #allocation0 [shape = 'u32[]', space=smem, size = 0x4, offset = 0x4, fixed_abs, tag = 'smem constant byte address 0x4 - core index']
  #allocation1 [shape = 'u32[72,128]{1,0:T(1,128)}', space=vmem, size = 0x9000, scoped, tag = 'internal scratch']
  #allocation2 [shape = 's32[1]{0}', space=sflag, size = 0x4, scoped, tag = 'scoped memory for tpu_custom_call.1']
  #allocation3 [shape = 'u8[512]{0}', space=smem, size = 0x200, scoped, tag = 'prefetched SMEM operand 0']
  %s0 = inlined_call_operand.hbm [shape: s32[4], index: 0, kind: input, shape index: {}]
  %s1 = inlined_call_operand.hbm [shape: f32[2,4,16,16], index: 1, kind: input, shape index: {}]
  %s2 = inlined_call_operand.hbm [shape: f32[2,4,16,16], index: 2, kind: output, shape index: {}]
  %s3 = sld [smem:[#allocation0]]
  $region41: #{tpu_custom_call.1} parent=0
    _
  %s5 = ssub.s32 1, %s3
  %s6 = scalar_select 0, %s5, %s3
  %s8 = sshll.u32 %s0, 4
  %s9 = int_to_ptr.hbm [resolvable:$true] %s8
  %11 = dma.hbm_to_smem %s9, 16, [#allocation3], [#allocation2]
  %13 = dma.done [#allocation2], 16
  %14 = sfence
  $region1: #{tpu_custom_call.1} parent=0
    #allocation4 [shape = 'u8[65536]{0}', space=vmem, size = 0x10000, scoped, tag = 'input window, operand 1']
    #allocation5 [shape = 's32[2]{0}', space=sflag, size = 0x8, scoped, tag = 'scoped memory for tpu_custom_call.1']
    #allocation6 [shape = 's32[2]{0}', space=sflag, size = 0x8, scoped, tag = 'scoped memory for tpu_custom_call.1']
    #allocation7 [shape = 'u8[65536]{0}', space=vmem, size = 0x10000, scoped, tag = 'output window, operand 0']
    %15 = vsyncpa [#allocation5], 0
    %s16 = scalar_lea.sflag [#allocation5], 1
    %17 = vsyncpa %s16, 0
    %18 = vsyncpa [#allocation6], 0
    %s19 = scalar_lea.sflag [#allocation6], 1
    %20 = vsyncpa %s19, 0
    loop: start=0, step=1, limit=4
    $region2: #{tpu_custom_call.1} parent=1 // loop_pre_header
      _
    $region3: #{tpu_custom_call.1} parent=1 // loop_header
      %s22 = sphi 0, %s26
      %p23 = scmp.ge.s32.totalorder %s22, 4
      %s32 = sphi 0, %s34
      %s35 = sphi 0, %s32
      %s36 = sphi 0, %s35
      %s52 = sphi 0, %s36
      %s58 = sphi 0, %s60
      %s61 = sphi 0, %s58
      %s62 = sphi 0, %s61
      %s78 = sphi 0, %s62
    $region4: #{tpu_custom_call.1} parent=1 // loop_header_branch
      %25 = sbr.rel (%p23) target = $region8
    $region5: #{tpu_custom_call.1} parent=1 // loop_body
      %s27 = ssub.s32 %s22, 1
      %s28 = ssub.s32 %s22, 2
      %s29 = sadd.s32 %s22, 1
      %s30 = ssub.s32 %s22, %s29
      %p31 = scmp.eq.s32.totalorder %s30, 0
      %s33 = sadd.s32 %s32, 1
      %s34 = scalar_select %p31, %s32, %s33
      %p37 = pneg %p31
      %p38 = scmp.eq.s32.totalorder %s22, 1
      %p39 = por %p37, %p38
      %p40 = scmp.ne.s32.totalorder %s32, %s35
      %p41 = scmp.eq.s32.totalorder %s22, 0
      %p42 = por %p40, %p41
      %p43 = scmp.ne.s32.totalorder %s32, %s35
      %p44 = scmp.eq.s32.totalorder %s27, 1
      %p45 = por %p43, %p44
      %p46 = scmp.ne.s32.totalorder %s35, %s36
      %p47 = scmp.eq.s32.totalorder %s27, 0
      %p48 = por %p46, %p47
      %p49 = scmp.ne.s32.totalorder %s35, %s36
      %p50 = scmp.eq.s32.totalorder %s28, 1
      %p51 = por %p49, %p50
      %p53 = scmp.ne.s32.totalorder %s36, %s52
      %p54 = scmp.eq.s32.totalorder %s28, 0
      %p55 = por %p53, %p54
      %s56 = ssub.s32 %s22, %s29
      %p57 = scmp.eq.s32.totalorder %s56, 0
      %s59 = sadd.s32 %s58, 1
      %s60 = scalar_select %p57, %s58, %s59
      %p63 = pneg %p57
      %p64 = scmp.eq.s32.totalorder %s22, 1
      %p65 = por %p63, %p64
      %p66 = scmp.ne.s32.totalorder %s58, %s61
      %p67 = scmp.eq.s32.totalorder %s22, 0
      %p68 = por %p66, %p67
      %p69 = scmp.ne.s32.totalorder %s58, %s61
      %p70 = scmp.eq.s32.totalorder %s27, 1
      %p71 = por %p69, %p70
      %p72 = scmp.ne.s32.totalorder %s61, %s62
      %p73 = scmp.eq.s32.totalorder %s27, 0
      %p74 = por %p72, %p73
      %p75 = scmp.ne.s32.totalorder %s61, %s62
      %p76 = scmp.eq.s32.totalorder %s28, 1
      %p77 = por %p75, %p76
      %p79 = scmp.ne.s32.totalorder %s62, %s78
      %p80 = scmp.eq.s32.totalorder %s28, 0
      %p81 = por %p79, %p80
      %p82 = scmp.le.s32.totalorder 1, %s22
      %p83 = scmp.lt.s32.totalorder %s22, 3
      %p84 = pnand %p82, %p83
      %p85 = pneg %p84
      // Predicated region
      $region9: #{tpu_custom_call.1} parent=5 // pred_check
        _
      $region10: #{tpu_custom_call.1} parent=5 // pred_check_branch
        %87 = sbr.rel (%p84) target = $region12
      $region11: #{tpu_custom_call.1} parent=5 // pred_region
        %s88 = ssub.s32 %s22, 1
      $region12: #{tpu_custom_call.1} parent=5 // pred_fallthru
        _
      %p89 = scmp.lt.s32.totalorder %s22, 2
      // Predicated region
      $region13: #{tpu_custom_call.1} parent=5 // pred_check
        %p90 = pneg %p89
      $region14: #{tpu_custom_call.1} parent=5 // pred_check_branch
        %92 = sbr.rel (%p90) target = $region16
      $region15: #{tpu_custom_call.1} parent=5 // pred_region
        // Predicated region
        $region17: #{tpu_custom_call.1} parent=15 // pred_check
          %p93 = pneg %p42
        $region18: #{tpu_custom_call.1} parent=15 // pred_check_branch
          %95 = sbr.rel (%p93) target = $region20
        $region19: #{tpu_custom_call.1} parent=15 // pred_region
          %s96 = sand.u32 %s32, 1
          %s97 = scalar_lea.sflag [#allocation5], %s96
          %s98 = sand.u32 %s32, 1
          %s99 = smul.addr %s98, 64
          %s100 = scalar_lea.vmem [#allocation4], %s99
          %102 = vsyncadd %s97, 0
          %s103 = smul.addr %s22, 8
          %s104 = smul.addr %s103, 8
          %s105 = scalar_lea.hbm %s1, %s104
          %s106 = sshll.u32 %s105, 4
          %s107 = int_to_ptr.hbm [resolvable:$true] %s106
          %s108 = sshll.u32 %s100, 4
          %s109 = int_to_ptr.vmem [resolvable:$true] %s108
          %114 = dma.hbm_to_vmem [thread:$0]  %s107, 1024, %s109, %s97, 128, 128, 8
        $region20: #{tpu_custom_call.1} parent=15 // pred_fallthru
          _
      $region16: #{tpu_custom_call.1} parent=5 // pred_fallthru
        _
      %p115 = scmp.le.s32.totalorder 1, %s22
      %p116 = scmp.lt.s32.totalorder %s22, 3
      %p117 = pnand %p115, %p116
      %p118 = pneg %p117
      // Predicated region
      $region21: #{tpu_custom_call.1} parent=5 // pred_check
        _
      $region22: #{tpu_custom_call.1} parent=5 // pred_check_branch
        %120 = sbr.rel (%p117) target = $region24
      $region23: #{tpu_custom_call.1} parent=5 // pred_region
        %s121 = ssub.s32 %s22, 1
        %s122 = sand.u32 %s35, 1
        %s123 = scalar_lea.sflag [#allocation5], %s122
        %s124 = sand.u32 %s35, 1
        %s125 = smul.addr %s124, 64
        %s126 = scalar_lea.vmem [#allocation4], %s125
        // Predicated region
        $region25: #{tpu_custom_call.1} parent=23 // pred_check
          %p127 = pneg %p48
        $region26: #{tpu_custom_call.1} parent=23 // pred_check_branch
          %129 = sbr.rel (%p127) target = $region28
        $region27: #{tpu_custom_call.1} parent=23 // pred_region
          %131 = dma.done %s123, 1024
        $region28: #{tpu_custom_call.1} parent=23 // pred_fallthru
          _
        %s132 = sand.u32 %s35, 1
        %s133 = scalar_lea.sflag [#allocation5], %s132
        %s134 = sand.u32 %s35, 1
        %s135 = smul.addr %s134, 64
        %s136 = scalar_lea.vmem [#allocation4], %s135
        %p137 = pneg %p48
        %p138 = pneg %p45
        %p139 = pneg %p74
        %p140 = pneg %p71
        %s141 = sand.u32 %s61, 1
        %s142 = scalar_lea.sflag [#allocation6], %s141
        %s143 = sand.u32 %s61, 1
        %s144 = smul.addr %s143, 64
        %s145 = scalar_lea.vmem [#allocation7], %s144
        %v146 = vlaneseq
        %v147 = vshrl.u32 %v146, 7
        %v148 = vadd.s32 %v147, 8
        %v149 = vlaneseq
        %v150 = vand.u32 %v149, 127
        %s151 = smul.u32 %s27, 2
        %s152 = sld [smem:[#allocation3 + %s151]]
        %p153 = scmp.gt.s32.totalorder %s152, 0
        %s154 = scalar_select %p153, %s152, 0
        %p155 = scmp.lt.s32.totalorder %s154, 8
        %s156 = scalar_select %p155, %s154, 8
        %s157 = sadd.s32 %s151, 1
        %s158 = sld [smem:[#allocation3 + %s157]]
        %p159 = scmp.gt.s32.totalorder %s158, 0
        %s160 = scalar_select %p159, %s158, 0
        %p161 = scmp.lt.s32.totalorder %s160, 8
        %s162 = scalar_select %p161, %s160, 8
        %s163 = ssub.s32 %s156, 4
        %s164 = ssub.s32 %s162, 4
        %v165 = vstv %s163
        %v166 = vadd.s32 %v150, %v165
        %vm167 = vcmp.gt.s32.totalorder %v166, 0
        %v168 = vsel %vm167, %v166, 0
        %vm169 = vcmp.lt.s32.totalorder %v168, 15
        %v170 = vsel %vm169, %v168, 15
        %vm171 = vcmp.eq.s32.totalorder %v147, %v170
        %vm172 = vcmp.eq.s32.totalorder %v148, %v170
        %v173 = vsel %vm171, 1, 0
        %v174 = vsel %vm172, 1, 0
        %v175 = vcvt.s32.f32 %v173
        %v176 = vcvt.s32.f32 %v174
        %v177 = vstv %s164
        %v178 = vadd.s32 %v147, %v177
        %v179 = vadd.s32 %v148, %v177
        %vm180 = vcmp.gt.s32.totalorder %v178, 0
        %v181 = vsel %vm180, %v178, 0
        %vm182 = vcmp.gt.s32.totalorder %v179, 0
        %v183 = vsel %vm182, %v179, 0
        %vm184 = vcmp.lt.s32.totalorder %v181, 15
        %v185 = vsel %vm184, %v181, 15
        %vm186 = vcmp.lt.s32.totalorder %v183, 15
        %v187 = vsel %vm186, %v183, 15
        %vm188 = vcmp.eq.s32.totalorder %v150, %v185
        %vm189 = vcmp.eq.s32.totalorder %v150, %v187
        %v190 = vsel %vm188, 1, 0
        %v191 = vsel %vm189, 1, 0
        %v192 = vcvt.s32.f32 %v190
        %v193 = vcvt.s32.f32 %v191
        %v194 = vld [vmem:[%s126] sm:$0xff]
        %v195 = vld [vmem:[%s126 + $0x8] sm:$0xff]
        %v196 = vld [vmem:[%s126 + $0x10] sm:$0xff]
        %v197 = vld [vmem:[%s126 + $0x18] sm:$0xff]
        %v198 = vld [vmem:[%s126 + $0x20] sm:$0xff]
        %v199 = vld [vmem:[%s126 + $0x28] sm:$0xff]
        %v200 = vld [vmem:[%s126 + $0x30] sm:$0xff]
        %v201 = vld [vmem:[%s126 + $0x38] sm:$0xff]
        %vm202 = vcmask 130048
        %v204 = vsel %vm202, %v194, 0
        %v207 = vsel %vm202, %v195, 0
        %v210 = vsel %vm202, %v196, 0
        %v213 = vsel %vm202, %v197, 0
        %v216 = vsel %vm202, %v198, 0
        %v219 = vsel %vm202, %v199, 0
        %v222 = vsel %vm202, %v200, 0
        %v225 = vsel %vm202, %v201, 0
        %227 = vmatpush.msra.mxu0 0.0
        %228 = vmatpush.msra.mxu0 0.0
        %229 = vmatpush.msra.mxu0 0.0
        %230 = vmatpush.msra.mxu0 0.0
        %231 = vmatpush.msra.mxu0 0.0
        %232 = vmatpush.msra.mxu0 0.0
        %233 = vmatpush.msra.mxu0 0.0
        %234 = vmatpush.msra.mxu0 0.0
        %235 = vmatpush.msra.mxu0 0.0
        %236 = vmatpush.msra.mxu0 0.0
        %237 = vmatpush.msra.mxu0 0.0
        %238 = vmatpush.msra.mxu0 0.0
        %239 = vmatpush.msra.mxu0 0.0
        %240 = vmatpush.msra.mxu0 0.0
        %241 = vmatpush.msra.mxu0 %v176
        %242 = vmatpush.msra.mxu0 %v175
        %243 = vmatmul.f32.gmra.mxu0 %v204
        %v244 = vpop.f32.mrf.mxu0
        %v245 = vadd.f32 0.0, %v244
        %246 = vmatmul.f32.gmra.mxu0 %v207
        %v247 = vpop.f32.mrf.mxu0
        %v248 = vadd.f32 0.0, %v247
        %249 = vmatmul.f32.gmra.mxu0 %v210
        %v250 = vpop.f32.mrf.mxu0
        %v251 = vadd.f32 0.0, %v250
        %252 = vmatmul.f32.gmra.mxu0 %v213
        %v253 = vpop.f32.mrf.mxu0
        %v254 = vadd.f32 0.0, %v253
        %255 = vmatmul.f32.gmra.mxu0 %v216
        %v256 = vpop.f32.mrf.mxu0
        %v257 = vadd.f32 0.0, %v256
        %258 = vmatmul.f32.gmra.mxu0 %v219
        %v259 = vpop.f32.mrf.mxu0
        %v260 = vadd.f32 0.0, %v259
        %261 = vmatmul.f32.gmra.mxu0 %v222
        %v262 = vpop.f32.mrf.mxu0
        %v263 = vadd.f32 0.0, %v262
        %264 = vmatmul.f32.gmra.mxu0 %v225
        %v265 = vpop.f32.mrf.mxu0
        %v266 = vadd.f32 0.0, %v265
        %267 = vdwg.mxu0
        %v269 = vsel %vm202, %v192, 0
        %v272 = vsel %vm202, %v193, 0
        %274 = vmatpush.msra.mxu0 0.0
        %275 = vmatpush.msra.mxu0 0.0
        %276 = vmatpush.msra.mxu0 0.0
        %277 = vmatpush.msra.mxu0 0.0
        %278 = vmatpush.msra.mxu0 0.0
        %279 = vmatpush.msra.mxu0 0.0
        %280 = vmatpush.msra.mxu0 0.0
        %281 = vmatpush.msra.mxu0 0.0
        %282 = vmatpush.msra.mxu0 0.0
        %283 = vmatpush.msra.mxu0 0.0
        %284 = vmatpush.msra.mxu0 0.0
        %285 = vmatpush.msra.mxu0 0.0
        %286 = vmatpush.msra.mxu0 0.0
        %287 = vmatpush.msra.mxu0 0.0
        %288 = vmatpush.msra.mxu0 %v248
        %289 = vmatpush.msra.mxu0 %v245
        %290 = vmatmul.f32.gmra.mxu0 %v269
        %v291 = vpop.f32.mrf.mxu0
        %v292 = vadd.f32 0.0, %v291
        %293 = vmatmul.f32.gmra.mxu0 %v272
        %v294 = vpop.f32.mrf.mxu0
        %v295 = vadd.f32 0.0, %v294
        %296 = vdwg.mxu0
        %297 = vmatpush.msra.mxu0 0.0
        %298 = vmatpush.msra.mxu0 0.0
        %299 = vmatpush.msra.mxu0 0.0
        %300 = vmatpush.msra.mxu0 0.0
        %301 = vmatpush.msra.mxu0 0.0
        %302 = vmatpush.msra.mxu0 0.0
        %303 = vmatpush.msra.mxu0 0.0
        %304 = vmatpush.msra.mxu0 0.0
        %305 = vmatpush.msra.mxu0 0.0
        %306 = vmatpush.msra.mxu0 0.0
        %307 = vmatpush.msra.mxu0 0.0
        %308 = vmatpush.msra.mxu0 0.0
        %309 = vmatpush.msra.mxu0 0.0
        %310 = vmatpush.msra.mxu0 0.0
        %311 = vmatpush.msra.mxu0 %v254
        %312 = vmatpush.msra.mxu0 %v251
        %313 = vmatmul.f32.gmra.mxu0 %v269
        %v314 = vpop.f32.mrf.mxu0
        %v315 = vadd.f32 0.0, %v314
        %316 = vmatmul.f32.gmra.mxu0 %v272
        %v317 = vpop.f32.mrf.mxu0
        %v318 = vadd.f32 0.0, %v317
        %319 = vdwg.mxu0
        %320 = vmatpush.msra.mxu0 0.0
        %321 = vmatpush.msra.mxu0 0.0
        %322 = vmatpush.msra.mxu0 0.0
        %323 = vmatpush.msra.mxu0 0.0
        %324 = vmatpush.msra.mxu0 0.0
        %325 = vmatpush.msra.mxu0 0.0
        %326 = vmatpush.msra.mxu0 0.0
        %327 = vmatpush.msra.mxu0 0.0
        %328 = vmatpush.msra.mxu0 0.0
        %329 = vmatpush.msra.mxu0 0.0
        %330 = vmatpush.msra.mxu0 0.0
        %331 = vmatpush.msra.mxu0 0.0
        %332 = vmatpush.msra.mxu0 0.0
        %333 = vmatpush.msra.mxu0 0.0
        %334 = vmatpush.msra.mxu0 %v260
        %335 = vmatpush.msra.mxu0 %v257
        %336 = vmatmul.f32.gmra.mxu0 %v269
        %v337 = vpop.f32.mrf.mxu0
        %v338 = vadd.f32 0.0, %v337
        %339 = vmatmul.f32.gmra.mxu0 %v272
        %v340 = vpop.f32.mrf.mxu0
        %v341 = vadd.f32 0.0, %v340
        %342 = vdwg.mxu0
        %343 = vmatpush.msra.mxu0 0.0
        %344 = vmatpush.msra.mxu0 0.0
        %345 = vmatpush.msra.mxu0 0.0
        %346 = vmatpush.msra.mxu0 0.0
        %347 = vmatpush.msra.mxu0 0.0
        %348 = vmatpush.msra.mxu0 0.0
        %349 = vmatpush.msra.mxu0 0.0
        %350 = vmatpush.msra.mxu0 0.0
        %351 = vmatpush.msra.mxu0 0.0
        %352 = vmatpush.msra.mxu0 0.0
        %353 = vmatpush.msra.mxu0 0.0
        %354 = vmatpush.msra.mxu0 0.0
        %355 = vmatpush.msra.mxu0 0.0
        %356 = vmatpush.msra.mxu0 0.0
        %357 = vmatpush.msra.mxu0 %v266
        %358 = vmatpush.msra.mxu0 %v263
        %359 = vmatmul.f32.gmra.mxu0 %v269
        %v360 = vpop.f32.mrf.mxu0
        %v361 = vadd.f32 0.0, %v360
        %362 = vmatmul.f32.gmra.mxu0 %v272
        %v363 = vpop.f32.mrf.mxu0
        %v364 = vadd.f32 0.0, %v363
        %365 = vdwg.mxu0
        %366 = vst.msk [vmem:[%s145] sm:$0xff] %vm202, %v292
        %367 = vst.msk [vmem:[%s145 + $0x8] sm:$0xff] %vm202, %v295
        %368 = vst.msk [vmem:[%s145 + $0x10] sm:$0xff] %vm202, %v315
        %369 = vst.msk [vmem:[%s145 + $0x18] sm:$0xff] %vm202, %v318
        %370 = vst.msk [vmem:[%s145 + $0x20] sm:$0xff] %vm202, %v338
        %371 = vst.msk [vmem:[%s145 + $0x28] sm:$0xff] %vm202, %v341
        %372 = vst.msk [vmem:[%s145 + $0x30] sm:$0xff] %vm202, %v361
        %373 = vst.msk [vmem:[%s145 + $0x38] sm:$0xff] %vm202, %v364
        %s374 = sand.u32 %s61, 1
        %s375 = scalar_lea.sflag [#allocation6], %s374
        %s376 = sand.u32 %s61, 1
        %s377 = smul.addr %s376, 64
        %s378 = scalar_lea.vmem [#allocation7], %s377
        // Predicated region
        $region29: #{tpu_custom_call.1} parent=23 // pred_check
          %p379 = pneg %p71
        $region30: #{tpu_custom_call.1} parent=23 // pred_check_branch
          %381 = sbr.rel (%p379) target = $region32
        $region31: #{tpu_custom_call.1} parent=23 // pred_region
          %383 = vsyncadd %s375, 0
          %s384 = smul.addr %s27, 8
          %s385 = smul.addr %s384, 8
          %s386 = scalar_lea.hbm %s2, %s385
          %s387 = sshll.u32 %s378, 4
          %s388 = int_to_ptr.vmem [resolvable:$true] %s387
          %s389 = sshll.u32 %s386, 4
          %s390 = int_to_ptr.hbm [resolvable:$true] %s389
          %395 = dma.vmem_to_hbm [thread:$0]  %s388, 1024, %s390, %s375, 128, 128, 8
        $region32: #{tpu_custom_call.1} parent=23 // pred_fallthru
          _
      $region24: #{tpu_custom_call.1} parent=5 // pred_fallthru
        _
      %p396 = scmp.le.s32.totalorder 2, %s22
      // Predicated region
      $region33: #{tpu_custom_call.1} parent=5 // pred_check
        %p397 = pneg %p396
      $region34: #{tpu_custom_call.1} parent=5 // pred_check_branch
        %399 = sbr.rel (%p397) target = $region36
      $region35: #{tpu_custom_call.1} parent=5 // pred_region
        %s400 = ssub.s32 %s22, 2
        // Predicated region
        $region37: #{tpu_custom_call.1} parent=35 // pred_check
          %p401 = pneg %p77
        $region38: #{tpu_custom_call.1} parent=35 // pred_check_branch
          %403 = sbr.rel (%p401) target = $region40
        $region39: #{tpu_custom_call.1} parent=35 // pred_region
          %s404 = sand.u32 %s62, 1
          %s405 = scalar_lea.sflag [#allocation6], %s404
          %s406 = sand.u32 %s62, 1
          %s407 = smul.addr %s406, 64
          %s408 = scalar_lea.vmem [#allocation7], %s407
          %410 = dma.done %s405, 1024
        $region40: #{tpu_custom_call.1} parent=35 // pred_fallthru
          _
      $region36: #{tpu_custom_call.1} parent=5 // pred_fallthru
        _
    $region6: #{tpu_custom_call.1} parent=1 // loop_footer
      %s26 = sadd.s32 1, %s22
    $region7: #{tpu_custom_call.1} parent=1 // loop_footer_branch
      %21 = sbr.rel target = $region3
    $region8: #{tpu_custom_call.1} parent=1 // loop_exit
      _
    %411 = vsyncpa [#allocation5], 1
    %s412 = scalar_lea.sflag [#allocation5], 1
    %413 = vsyncpa %s412, 1
    %414 = vsyncpa [#allocation6], 1
    %s415 = scalar_lea.sflag [#allocation6], 1
    %416 = vsyncpa %s415, 1

</llo_original>
